<compile_context>
chip_gen: v5e
topology: v5e:2x2
jax: 0.10.0
libtpu: 0.0.40
codegen_flags: <defaults>
</compile_context>

<pallas_src>
import jax
import jax.numpy as jnp
from jax.experimental import pallas as pl
from jax.experimental.pallas import tpu as pltpu


# ---------------------------------------------------------------------------
# Path 1 (default): zero-copy identity via output aliasing.
# ---------------------------------------------------------------------------
def _identity_alias_kernel(x_ref, o_ref):
    # o_ref is the same HBM buffer as x_ref (input_output_aliases={0: 0});
    # there is nothing to load, compute or store.
    del x_ref, o_ref


def identity_pallas(x: jax.Array) -> jax.Array:
    """Identity forward: returns x.  The output buffer is aliased to the input,
    so the kernel moves no data (no HBM read, no HBM write, no VMEM traffic)."""
    return pl.pallas_call(
        _identity_alias_kernel,
        out_shape=jax.ShapeDtypeStruct(x.shape, x.dtype),
        in_specs=[pl.BlockSpec(memory_space=pl.ANY)],   # leave input in HBM
        out_specs=pl.BlockSpec(memory_space=pl.ANY),    # output IS the input buffer
        input_output_aliases={0: 0},
    )(x)


# ---------------------------------------------------------------------------
# Path 2 (optional): materialized copy, tiled + lane-dense, near HBM roofline.
# ---------------------------------------------------------------------------
def _copy_kernel(x_ref, o_ref):
    # Straight VMEM tile copy: load the current block, store it unchanged.
    o_ref[...] = x_ref[...]


def identity_pallas_copy(x: jax.Array) -> jax.Array:
    """Identity forward that materializes a fresh copy of x through VMEM."""
    orig_shape = x.shape
    total = int(x.size)
    if total == 0:
        return x

    # Lane-dense flatten: prefer a last dim that is a large multiple of 128 so
    # loads/stores use full-width vregs (no masked partial stores on narrow W).
    x2d = None
    for lane in (1024, 512, 256, 128):
        if total % lane == 0:
            x2d = x.reshape(total // lane, lane)
            break
    if x2d is None:
        # Fallback: keep the (full-extent) trailing dim; full-extent lane blocks
        # are always legal regardless of width.
        x2d = x.reshape(1, total) if x.ndim <= 1 else x.reshape(-1, orig_shape[-1])

    R, L = x2d.shape
    itemsize = x2d.dtype.itemsize

    # Packed sublane quantum: 8 rows for 32-bit, 16 for 16-bit, 32 for 8-bit.
    sublane = 8 * max(1, 4 // max(itemsize, 1))

    # ~1 MiB per block => ~4 MiB VMEM with double-buffered input + output,
    # comfortably inside every generation's default scoped-VMEM budget.
    target_block_bytes = 1 << 20
    tile_r = (target_block_bytes // max(L * itemsize, 1)) // sublane * sublane
    tile_r = max(sublane, tile_r)
    if tile_r >= R:
        tile_r = R                     # whole array fits one block (full-extent dim)
    grid = (pl.cdiv(R, tile_r),)

    out2d = pl.pallas_call(
        _copy_kernel,
        out_shape=jax.ShapeDtypeStruct((R, L), x2d.dtype),
        grid=grid,
        in_specs=[pl.BlockSpec((tile_r, L), lambda i: (i, 0))],
        out_specs=pl.BlockSpec((tile_r, L), lambda i: (i, 0)),
        compiler_params=pltpu.CompilerParams(
            dimension_semantics=("parallel",),   # no cross-iter dep; use both v7x TCs
        ),
    )(x2d)
    return out2d.reshape(orig_shape)


if __name__ == "__main__":
    key = jax.random.PRNGKey(0)
    # Small NCHW input consistent with a conv-style model: batch=2, C=4, H=W=16.
    x = jax.random.normal(key, (2, 4, 16, 16), dtype=jnp.float32)
    x_host = jax.device_get(x)  # reference copy, independent of device buffers

    # Default zero-copy (aliased) identity.
    y = jax.block_until_ready(identity_pallas(x))
    assert y.shape == tuple(x_host.shape)
    assert y.dtype == x_host.dtype
    assert bool(jnp.array_equal(y, jnp.asarray(x_host)))

    # Explicit tiled, lane-dense copy path.
    y2 = jax.block_until_ready(identity_pallas_copy(jnp.asarray(x_host)))
    assert y2.shape == tuple(x_host.shape)
    assert y2.dtype == x_host.dtype
    assert bool(jnp.array_equal(y2, jnp.asarray(x_host)))

    print("KERNEL_OK")
</pallas_src>

<mosaic_0001>
module attributes {stable_mosaic.version = 11 : i64} {
  func.func @_identity_alias_kernel(%arg0: memref<2x4x16x16xf32, #tpu.memory_space<any>>, %arg1: memref<2x4x16x16xf32, #tpu.memory_space<any>>) attributes {dimension_semantics = [], scalar_prefetch = 0 : i64, scratch_operands = 0 : i64, tpu.core_type = #tpu.core_type<tc>} {
    return
  }
}

</mosaic_0001>

<llo_original>
// kernel: tpu_custom_call.1
$region0: #{tpu_custom_call.1}
  #allocation0 [shape = 'u32[]', space=smem, size = 0x4, offset = 0x4, fixed_abs, tag = 'smem constant byte address 0x4 - core index']
  #allocation1 [shape = 'u32[72,128]{1,0:T(1,128)}', space=vmem, size = 0x9000, scoped, tag = 'internal scratch']
  %s0 = inlined_call_operand.hbm [shape: f32[2,4,16,16], index: 0, kind: input, shape index: {}, may-alias: {0,1}]
  %s1 = inlined_call_operand.hbm [shape: f32[2,4,16,16], index: 1, kind: output, shape index: {}, may-alias: {0,1}]
  %s2 = sld [smem:[#allocation0]]
  $region2: #{tpu_custom_call.1} parent=0
    _
  %s4 = ssub.s32 1, %s2
  %s5 = scalar_select 0, %s4, %s2

</llo_original>
